<compile_context>
chip_gen: v7x
topology: tpu7x:2x2x1
jax: 0.10.0
libtpu: 0.0.40
codegen_flags: <defaults>
</compile_context>

<pallas_src>
import functools

import jax
import jax.numpy as jnp
from jax import lax
from jax.experimental import pallas as pl
from jax.experimental.pallas import tpu as pltpu


def _round_up(a, b):
    return (a + b - 1) // b * b


def focal_loss_kernel(x_ref, tgt_ref, cw_ref, out_ref, acc_ref, *, gamma):
    i = pl.program_id(0)

    @pl.when(i == 0)
    def _():
        acc_ref[...] = jnp.zeros_like(acc_ref)
        out_ref[0, 0] = jnp.float32(0.0)

    x = x_ref[...].astype(jnp.float32)      # (C, TB): classes on sublanes, batch on lanes
    tgt = tgt_ref[...]                      # (1, TB) int32 labels
    cw = cw_ref[...].astype(jnp.float32)    # (1, TB) per-example weight (0 for padded rows)

    C, TB = x.shape
    row_ids = lax.broadcasted_iota(jnp.int32, (C, TB), 0)
    is_target = row_ids == tgt              # broadcast (1, TB) across sublanes

    # zi = -x everywhere except zi[target[b], b] = +x[target[b], b]
    zi = jnp.where(is_target, x, -x)

    # Shared-exponential, numerically stable sigmoid / log-sigmoid:
    #   e = exp(-|zi|) in (0, 1]
    #   log p  = log(sigmoid(zi)) = min(zi, 0) - log1p(e)
    #   1 - p  = sigmoid(-zi)     = where(zi >= 0, e, 1) / (1 + e)
    e = jnp.exp(-jnp.abs(zi))
    log1p_e = jnp.log1p(e)
    log_p = jnp.minimum(zi, 0.0) - log1p_e

    g = float(gamma)
    if g == 0.0:
        weighted = log_p                    # (1-p)**0 == 1: skip the whole branch
    else:
        one_minus_p = jnp.where(zi >= 0.0, e, jnp.float32(1.0)) / (1.0 + e)
        if g == 1.0:
            first = one_minus_p
        elif g == 2.0:
            first = one_minus_p * one_minus_p
        else:
            first = jnp.power(one_minus_p, jnp.float32(g))
        weighted = first * log_p

    # multipled[b] = sum_j first * log_p  -> sublane (class) reduction, (1, TB)
    per_example = jnp.sum(weighted, axis=0, keepdims=True)
    # lane-wise running partial: weight[target[b]] * multipled[b]
    acc_ref[...] += cw * per_example

    @pl.when(i == pl.num_programs(0) - 1)
    def _():
        # single cross-lane reduce at the very end; loss = -sum_b w_b * multipled_b
        out_ref[0, 0] = -jnp.sum(acc_ref[...])


def focal_loss(x, target, weight, gamma=1.0, block_b=None):
    B, C = x.shape

    if block_b is None:
        # Size the lane (batch) tile so the double-buffered (C, TB) x-tiles plus
        # f32 intermediates stay well under the smallest default scoped-VMEM
        # budget (v5e: 16 MiB, v7x physical: 64 MiB) while being large enough
        # to amortize the ~0.35 us per-grid-step overhead.
        vmem_budget = 8 * 1024 * 1024                       # bytes for x double-buffer
        cap = max(128, (vmem_budget // (max(C, 1) * 4 * 2)) // 128 * 128)
        block_b = max(128, min(2048, cap, _round_up(B, 128)))
    TB = int(block_b)

    B_pad = _round_up(B, TB)
    pad = B_pad - B

    tgt_i32 = target.astype(jnp.int32)

    # Batch on lanes, classes on sublanes.  Keep x in its native dtype (e.g.
    # bf16) - the kernel upcasts, halving HBM traffic for bf16 inputs.
    xt = jnp.swapaxes(x, 0, 1)                              # (C, B)
    xt = jnp.pad(xt, ((0, 0), (0, pad)))                    # zero-pad batch
    tgt2d = jnp.pad(tgt_i32, (0, pad)).reshape(1, B_pad)    # padded rows -> class 0

    # Per-example class weight gathered in XLA; 0 for padded rows => they
    # contribute exactly 0 to the loss.
    cw = weight.astype(jnp.float32)[tgt_i32]
    cw2d = jnp.pad(cw, (0, pad)).reshape(1, B_pad)

    grid = (B_pad // TB,)
    itemsize = jnp.dtype(x.dtype).itemsize
    cost = pl.CostEstimate(
        flops=int(12 * B_pad * C),
        transcendentals=int(2 * B_pad * C),
        bytes_accessed=int(B_pad * C * itemsize + B_pad * 8 + 4),
    )

    out = pl.pallas_call(
        functools.partial(focal_loss_kernel, gamma=float(gamma)),
        out_shape=jax.ShapeDtypeStruct((1, 1), jnp.float32),
        grid_spec=pltpu.PrefetchScalarGridSpec(
            num_scalar_prefetch=0,
            grid=grid,
            in_specs=[
                pl.BlockSpec((C, TB), lambda i: (0, i)),    # logits tile
                pl.BlockSpec((1, TB), lambda i: (0, i)),    # target labels
                pl.BlockSpec((1, TB), lambda i: (0, i)),    # gathered class weights
            ],
            out_specs=pl.BlockSpec(memory_space=pltpu.MemorySpace.SMEM),
            scratch_shapes=[pltpu.VMEM((1, TB), jnp.float32)],  # lane-wise accumulator
        ),
        compiler_params=pltpu.CompilerParams(
            dimension_semantics=("arbitrary",),             # batch axis is a reduction
        ),
        cost_estimate=cost,
    )(xt, tgt2d, cw2d)
    return out[0, 0]


def focal_loss_ref(x, target, weight, gamma=1.0):
    # Pure-JAX reference matching the PyTorch module (naive formulation).
    B, C = x.shape
    onehot = jax.nn.one_hot(target, C, dtype=jnp.float32)
    zi = jnp.where(onehot > 0, x.astype(jnp.float32), -x.astype(jnp.float32))
    p = jax.nn.sigmoid(zi)
    multipled = jnp.sum(((1.0 - p) ** gamma) * jnp.log(p), axis=1)
    class_weights = weight[target].astype(jnp.float32)
    return -jnp.dot(class_weights, multipled)


if __name__ == "__main__":
    key = jax.random.PRNGKey(0)
    kx, kt, kw, kx2, kt2 = jax.random.split(key, 5)

    # Small shapes consistent with the module's forward (batch of logits + labels).
    B, C = 8, 16
    x = jax.random.normal(kx, (B, C), dtype=jnp.float32)
    target = jax.random.randint(kt, (B,), 0, C, dtype=jnp.int32)
    weight = jax.random.uniform(kw, (C,), dtype=jnp.float32, minval=0.5, maxval=1.5)

    for gamma in (1.0, 2.0, 0.0):
        loss = jax.block_until_ready(focal_loss(x, target, weight, gamma=gamma))
        ref = focal_loss_ref(x, target, weight, gamma=gamma)
        assert jnp.allclose(loss, ref, rtol=1e-5, atol=1e-5), (gamma, loss, ref)

    # Multi-tile + padding path (exercises the cross-step VMEM accumulator).
    B2, C2 = 300, 7
    x2 = jax.random.normal(kx2, (B2, C2), dtype=jnp.float32)
    target2 = jax.random.randint(kt2, (B2,), 0, C2, dtype=jnp.int32)
    weight2 = jnp.linspace(0.5, 1.5, C2, dtype=jnp.float32)
    loss2 = jax.block_until_ready(
        focal_loss(x2, target2, weight2, gamma=2.0, block_b=128))
    ref2 = focal_loss_ref(x2, target2, weight2, gamma=2.0)
    assert jnp.allclose(loss2, ref2, rtol=1e-4, atol=1e-4), (loss2, ref2)

    print("KERNEL_OK")
</pallas_src>

<mosaic_0001>
module attributes {stable_mosaic.version = 11 : i64} {
  func.func @focal_loss_kernel(%arg0: i32, %arg1: memref<16x128xf32, #tpu.memory_space<vmem>>, %arg2: memref<1x128xi32, #tpu.memory_space<vmem>>, %arg3: memref<1x128xf32, #tpu.memory_space<vmem>>, %arg4: memref<1x1xf32, #tpu.memory_space<smem>>, %arg5: memref<1x128xf32, #tpu.memory_space<vmem>>) attributes {dimension_semantics = [#tpu.dimension_semantics<arbitrary>], iteration_bounds = array<i64: 1>, scalar_prefetch = 0 : i64, scratch_operands = 1 : i64, tpu.core_type = #tpu.core_type<tc>, window_params = [{transform_indices = @transform_0, window_bounds = array<i64: 16, 128>}, {transform_indices = @transform_1, window_bounds = array<i64: 1, 128>}, {transform_indices = @transform_2, window_bounds = array<i64: 1, 128>}, {transform_indices = @transform_3, window_bounds = array<i64: 1, 1>}]} {
    %c0_i32 = arith.constant 0 : i32
    %0 = arith.cmpi eq, %arg0, %c0_i32 : i32
    %1 = arith.extui %0 : i1 to i32
    %c0_i32_0 = arith.constant 0 : i32
    %2 = arith.cmpi ne, %1, %c0_i32_0 : i32
    scf.if %2 {
      %cst_18 = arith.constant 0.000000e+00 : f32
      %37 = vector.broadcast %cst_18 : f32 to vector<1x128xf32>
      %c0_19 = arith.constant 0 : index
      %c0_20 = arith.constant 0 : index
      %38 = vector.load %arg5[%c0_19, %c0_20] : memref<1x128xf32, #tpu.memory_space<vmem>>, vector<1x128xf32>
      tpu.vector_store %arg5[%c0_19, %c0_20], %37 {strides = array<i32>} : memref<1x128xf32, #tpu.memory_space<vmem>>, vector<1x128xf32>,
      %cst_21 = arith.constant 0.000000e+00 : f32
      %c0_22 = arith.constant 0 : index
      %c0_23 = arith.constant 0 : index
      %39 = memref.load %arg4[%c0_22, %c0_23] : memref<1x1xf32, #tpu.memory_space<smem>>
      memref.store %cst_21, %arg4[%c0_22, %c0_23] : memref<1x1xf32, #tpu.memory_space<smem>>
    } else {
    }
    %c0 = arith.constant 0 : index
    %c0_1 = arith.constant 0 : index
    %3 = vector.load %arg1[%c0, %c0_1] : memref<16x128xf32, #tpu.memory_space<vmem>>, vector<16x128xf32>
    %c0_2 = arith.constant 0 : index
    %c0_3 = arith.constant 0 : index
    %4 = vector.load %arg2[%c0_2, %c0_3] : memref<1x128xi32, #tpu.memory_space<vmem>>, vector<1x128xi32>
    %c0_4 = arith.constant 0 : index
    %c0_5 = arith.constant 0 : index
    %5 = vector.load %arg3[%c0_4, %c0_5] : memref<1x128xf32, #tpu.memory_space<vmem>>, vector<1x128xf32>
    %6 = tpu.iota {dimensions = array<i32: 0>} : vector<16x128xi32>
    %7 = vector.broadcast %4 : vector<1x128xi32> to vector<16x128xi32>
    %8 = arith.cmpi eq, %6, %7 : vector<16x128xi32>
    %cst = arith.constant 0.000000e+00 : f32
    %9 = vector.broadcast %cst : f32 to vector<16x128xf32>
    %10 = arith.subf %9, %3 : vector<16x128xf32>
    %11 = arith.select %8, %3, %10 : vector<16x128xi1>, vector<16x128xf32>
    %12 = math.absf %11 : vector<16x128xf32>
    %cst_6 = arith.constant 0.000000e+00 : f32
    %13 = vector.broadcast %cst_6 : f32 to vector<16x128xf32>
    %14 = arith.subf %13, %12 : vector<16x128xf32>
    %15 = math.exp %14 : vector<16x128xf32>
    %16 = math.log1p %15 : vector<16x128xf32>
    %cst_7 = arith.constant 0.000000e+00 : f32
    %17 = vector.broadcast %cst_7 : f32 to vector<16x128xf32>
    %18 = arith.minimumf %11, %17 : vector<16x128xf32>
    %19 = arith.subf %18, %16 : vector<16x128xf32>
    %cst_8 = arith.constant 0.000000e+00 : f32
    %20 = vector.broadcast %cst_8 : f32 to vector<16x128xf32>
    %21 = arith.cmpf oge, %11, %20 : vector<16x128xf32>
    %cst_9 = arith.constant 1.000000e+00 : f32
    %22 = vector.broadcast %cst_9 : f32 to vector<16x128xf32>
    %23 = arith.select %21, %15, %22 : vector<16x128xi1>, vector<16x128xf32>
    %cst_10 = arith.constant 1.000000e+00 : f32
    %24 = vector.broadcast %cst_10 : f32 to vector<16x128xf32>
    %25 = arith.addf %24, %15 : vector<16x128xf32>
    %26 = arith.divf %23, %25 : vector<16x128xf32>
    %27 = arith.mulf %26, %19 : vector<16x128xf32>
    %cst_11 = arith.constant dense<0.000000e+00> : vector<128xf32>
    %28 = vector.multi_reduction <add>, %27, %cst_11 [0] : vector<16x128xf32> to vector<128xf32>
    %29 = vector.shape_cast %28 : vector<128xf32> to vector<1x128xf32>
    %c0_12 = arith.constant 0 : index
    %c0_13 = arith.constant 0 : index
    %30 = vector.load %arg5[%c0_12, %c0_13] : memref<1x128xf32, #tpu.memory_space<vmem>>, vector<1x128xf32>
    %31 = arith.mulf %5, %29 : vector<1x128xf32>
    %32 = arith.addf %30, %31 : vector<1x128xf32>
    %c0_14 = arith.constant 0 : index
    %c0_15 = arith.constant 0 : index
    %33 = vector.load %arg5[%c0_14, %c0_15] : memref<1x128xf32, #tpu.memory_space<vmem>>, vector<1x128xf32>
    tpu.vector_store %arg5[%c0_14, %c0_15], %32 {strides = array<i32>} : memref<1x128xf32, #tpu.memory_space<vmem>>, vector<1x128xf32>,
    %c0_i32_16 = arith.constant 0 : i32
    %34 = arith.cmpi eq, %arg0, %c0_i32_16 : i32
    %35 = arith.extui %34 : i1 to i32
    %c0_i32_17 = arith.constant 0 : i32
    %36 = arith.cmpi ne, %35, %c0_i32_17 : i32
    scf.if %36 {
      %c0_18 = arith.constant 0 : index
      %c0_19 = arith.constant 0 : index
      %37 = vector.load %arg5[%c0_18, %c0_19] : memref<1x128xf32, #tpu.memory_space<vmem>>, vector<1x128xf32>
      %38 = vector.shape_cast %37 : vector<1x128xf32> to vector<1x1x128xf32>
      %cst_20 = arith.constant dense<0.000000e+00> : vector<1xf32>
      %39 = vector.multi_reduction <add>, %38, %cst_20 [1, 2] : vector<1x1x128xf32> to vector<1xf32>
      %40 = vector.shape_cast %39 : vector<1xf32> to vector<1x1x1xf32>
      %41 = vector.extract %40[0, 0, 0] : f32 from vector<1x1x1xf32>
      %cst_21 = arith.constant 0.000000e+00 : f32
      %42 = arith.subf %cst_21, %41 : f32
      %c0_22 = arith.constant 0 : index
      %c0_23 = arith.constant 0 : index
      %43 = memref.load %arg4[%c0_22, %c0_23] : memref<1x1xf32, #tpu.memory_space<smem>>
      memref.store %42, %arg4[%c0_22, %c0_23] : memref<1x1xf32, #tpu.memory_space<smem>>
    } else {
    }
    return
  }
  func.func @transform_0(%arg0: i32) -> (i32, i32) {
    %c0_i32 = arith.constant 0 : i32
    %c0_i32_0 = arith.constant 0 : i32
    return %c0_i32, %arg0 : i32, i32
  }
  func.func @transform_1(%arg0: i32) -> (i32, i32) {
    %c0_i32 = arith.constant 0 : i32
    %c0_i32_0 = arith.constant 0 : i32
    return %c0_i32, %arg0 : i32, i32
  }
  func.func @transform_2(%arg0: i32) -> (i32, i32) {
    %c0_i32 = arith.constant 0 : i32
    %c0_i32_0 = arith.constant 0 : i32
    return %c0_i32, %arg0 : i32, i32
  }
  func.func @transform_3(%arg0: i32) -> (i32, i32) {
    %c0_i32 = arith.constant 0 : i32
    %c0_i32_0 = arith.constant 0 : i32
    %c0_i32_1 = arith.constant 0 : i32
    return %c0_i32, %c0_i32_0 : i32, i32
  }
}

</mosaic_0001>

<llo_original>
// kernel: tpu_custom_call.1
$region0: #{tpu_custom_call.1}
  #allocation0 [shape = 'u32[]', space=smem, size = 0x4, offset = 0x4, fixed_abs, tag = 'smem constant byte address 0x4 - core index']
  #allocation1 [shape = 'u32[144,128]{1,0:T(1,128)}', space=vmem, size = 0x12000, scoped, tag = 'internal scratch']
  #allocation2 [shape = 'f32[1,128]{1,0:T(1,128)}', space=vmem, size = 0x200, scoped, tag = 'scratch operand']
  %s0 = inlined_call_operand.hbm [shape: f32[16,128], index: 0, kind: input, shape index: {}]
  %s1 = inlined_call_operand.vmem [shape: s32[1,128], index: 1, kind: input, shape index: {}]
  %s2 = inlined_call_operand.vmem [shape: f32[1,128], index: 2, kind: input, shape index: {}]
  %s3 = inlined_call_operand.hbm [shape: f32[1,1], index: 3, kind: output, shape index: {}]
  %s4 = sld [smem:[#allocation0]]
  $region34: #{tpu_custom_call.1} parent=0
    _
  %s6 = ssub.s32 1, %s4
  %s7 = scalar_select 0, %s6, %s4
  $region1: #{tpu_custom_call.1} parent=0
    #allocation3 [shape = 'u8[8192]{0}', space=vmem, size = 0x2000, scoped, tag = 'input window, operand 0, single buffered']
    #allocation4 [shape = 's32[1]{0}', space=sflag, size = 0x4, scoped, tag = 'scoped memory for tpu_custom_call.1']
    #allocation5 [shape = 's32[1]{0}', space=sflag, size = 0x4, scoped, tag = 'scoped memory for tpu_custom_call.1']
    #allocation6 [shape = 'u8[512]{0}', space=smem, size = 0x200, scoped, tag = 'output window, operand 0, single buffered']
    %8 = vsyncpa [#allocation4], 0
    %9 = vsyncpa [#allocation5], 0
    // Predicated region
    $region2: #{tpu_custom_call.1} parent=1 // pred_check
      _
    $region3: #{tpu_custom_call.1} parent=1 // pred_check_branch
      %11 = sbr.rel (0) target = $region5
    $region4: #{tpu_custom_call.1} parent=1 // pred_region
      %s13 = ssub.s32 256, 256
      %14 = vsyncadd [#allocation4], %s13
      %s15 = sshll.u32 [#allocation3], 4
      %s16 = int_to_ptr.vmem [resolvable:$true] %s15
      %21 = dma.hbm_to_vmem [thread:$0]  %s0, 256, %s16, [#allocation4], 128, 128, 8
    $region5: #{tpu_custom_call.1} parent=1 // pred_fallthru
      _
    // Predicated region
    $region6: #{tpu_custom_call.1} parent=1 // pred_check
      _
    $region7: #{tpu_custom_call.1} parent=1 // pred_check_branch
      %23 = sbr.rel (0) target = $region9
    $region8: #{tpu_custom_call.1} parent=1 // pred_region
      _
    $region9: #{tpu_custom_call.1} parent=1 // pred_fallthru
      _
    // Predicated region
    $region10: #{tpu_custom_call.1} parent=1 // pred_check
      _
    $region11: #{tpu_custom_call.1} parent=1 // pred_check_branch
      %25 = sbr.rel (0) target = $region13
    $region12: #{tpu_custom_call.1} parent=1 // pred_region
      _
    $region13: #{tpu_custom_call.1} parent=1 // pred_fallthru
      _
    // Predicated region
    $region14: #{tpu_custom_call.1} parent=1 // pred_check
      _
    $region15: #{tpu_custom_call.1} parent=1 // pred_check_branch
      %27 = sbr.rel (0) target = $region17
    $region16: #{tpu_custom_call.1} parent=1 // pred_region
      %28 = dma.done [#allocation4], 256
    $region17: #{tpu_custom_call.1} parent=1 // pred_fallthru
      _
    %p29 = scmp.eq.s32.totalorder 0, 0
    // Predicated region
    $region18: #{tpu_custom_call.1} parent=1 // pred_check
      %p30 = pneg %p29
    $region19: #{tpu_custom_call.1} parent=1 // pred_check_branch
      %32 = sbr.rel (%p30) target = $region21
    $region20: #{tpu_custom_call.1} parent=1 // pred_region
      %33 = vst [vmem:[#allocation2] sm:$0x1] 0.0
      %s34 = scalar_lea.smem [#allocation6], 0
      %35 = sst [smem:[%s34]] 0.0
    $region21: #{tpu_custom_call.1} parent=1 // pred_fallthru
      _
    %v36 = vld [vmem:[#allocation3] sm:$0xff]
    %v37 = vld [vmem:[#allocation3 + $0x8] sm:$0xff]
    %v38 = vld [vmem:[%s1] sm:$0x1]
    %v39 = vld [vmem:[%s2] sm:$0x1]
    %v40 = vlaneseq
    %v41 = vshrl.u32 %v40, 7
    %v42 = vadd.s32 %v41, 8
    %v43 = vlaneseq
    %v44 = vshrl.u32 %v43, 7
    %v45 = vsub.s32 0, %v44
    %v46 = vrot.slane %v38, %v45
    %vm47 = vcmp.eq.s32.totalorder %v41, %v46
    %vm48 = vcmp.eq.s32.totalorder %v42, %v46
    %v49 = vsub.f32 0.0, %v36
    %v50 = vsub.f32 0.0, %v37
    %v51 = vsel %vm47, %v36, %v49
    %v52 = vsel %vm48, %v37, %v50
    %v53 = vand.u32 2147483647, %v51
    %v54 = vand.u32 2147483647, %v52
    %v55 = vsub.f32 0.0, %v53
    %v56 = vsub.f32 0.0, %v54
    %v57 = vmul.f32 %v55, 1.442695
    %v58 = vpow.pop %v57
    %v59 = vmul.f32 %v56, 1.442695
    %v60 = vpow.pop %v59
    %v61 = vadd.f32 %v58, 1.0
    %v62 = vlog2.pop %v61
    %v63 = vmul.f32 %v62, 0.6931472
    %v64 = vmul.f32 -0.5, %v58
    %v65 = vadd.f32 %v64, 1.0
    %v66 = vmul.f32 %v65, %v58
    %v67 = vand.u32 2147483647, %v58
    %vm68 = vcmp.lt.f32.partialorder %v67, 0.0004427343
    %v69 = vsel %vm68, %v66, %v63
    %v70 = vadd.f32 %v60, 1.0
    %v71 = vlog2.pop %v70
    %v72 = vmul.f32 %v71, 0.6931472
    %v73 = vmul.f32 -0.5, %v60
    %v74 = vadd.f32 %v73, 1.0
    %v75 = vmul.f32 %v74, %v60
    %v76 = vand.u32 2147483647, %v60
    %vm77 = vcmp.lt.f32.partialorder %v76, 0.0004427343
    %v78 = vsel %vm77, %v75, %v72
    %v79 = vmin.f32 %v51, 0.0
    %v80 = vmin.f32 %v52, 0.0
    %v81 = vsub.f32 %v79, %v69
    %v82 = vsub.f32 %v80, %v78
    %vm83 = vcmp.ge.f32.partialorder %v51, 0.0
    %vm84 = vcmp.ge.f32.partialorder %v52, 0.0
    %v85 = vsel %vm83, %v58, 1.0
    %v86 = vsel %vm84, %v60, 1.0
    %v87 = vadd.f32 %v58, 1.0
    %v88 = vadd.f32 %v60, 1.0
    %v89 = vrcp.pop %v87
    %v90 = vmul.f32 %v85, %v89
    %v91 = vrcp.pop %v88
    %v92 = vmul.f32 %v86, %v91
    %v93 = vmul.f32 %v90, %v81
    %v94 = vmul.f32 %v92, %v82
    %v95 = vadd.f32 %v93, %v94
    %v96 = vrot.slane %v95, 4
    %v97 = vadd.f32 %v95, %v96
    %v98 = vrot.slane %v97, 2
    %v99 = vadd.f32 %v97, %v98
    %v100 = vrot.slane %v99, 1
    %v101 = vadd.f32 %v99, %v100
    %v102 = vld [vmem:[#allocation2] sm:$0x1]
    %v103 = vmul.f32 %v39, %v101
    %v104 = vadd.f32 %v102, %v103
    %105 = vst [vmem:[#allocation2] sm:$0x1] %v104
    // Predicated region
    $region22: #{tpu_custom_call.1} parent=1 // pred_check
      %p106 = pneg %p29
    $region23: #{tpu_custom_call.1} parent=1 // pred_check_branch
      %108 = sbr.rel (%p106) target = $region25
    $region24: #{tpu_custom_call.1} parent=1 // pred_region
      %v109 = vld [vmem:[#allocation2] sm:$0x1]
      %vm110 = vcmask 1040384
      %v111 = vsel %vm110, %v109, 0.0
      %112 = vadd.xlane.f32.xlu0 %v111
      %v113 = vpop.xlane.xlu0 %112
      %v114 = vrot.slane %v113, 4
      %v115 = vadd.f32 %v113, %v114
      %v116 = vrot.slane %v115, 2
      %v117 = vadd.f32 %v115, %v116
      %v118 = vrot.slane %v117, 1
      %v119 = vadd.f32 %v117, %v118
      %s120 = vtos %v119
      %s121 = ssub.f32 0.0, %s120
      %s122 = scalar_lea.smem [#allocation6], 0
      %123 = sst [smem:[%s122]] %s121
    $region25: #{tpu_custom_call.1} parent=1 // pred_fallthru
      _
    // Predicated region
    $region26: #{tpu_custom_call.1} parent=1 // pred_check
      _
    $region27: #{tpu_custom_call.1} parent=1 // pred_check_branch
      %125 = sbr.rel (0) target = $region29
    $region28: #{tpu_custom_call.1} parent=1 // pred_region
      %s127 = ssub.s32 16, 16
      %128 = vsyncadd [#allocation5], %s127
      %131 = dma.smem_to_hbm [#allocation6], 16, %s3, [#allocation5]
    $region29: #{tpu_custom_call.1} parent=1 // pred_fallthru
      _
    // Predicated region
    $region30: #{tpu_custom_call.1} parent=1 // pred_check
      _
    $region31: #{tpu_custom_call.1} parent=1 // pred_check_branch
      %133 = sbr.rel (0) target = $region33
    $region32: #{tpu_custom_call.1} parent=1 // pred_region
      %134 = dma.done [#allocation5], 16
    $region33: #{tpu_custom_call.1} parent=1 // pred_fallthru
      _
    %135 = sfence
    %136 = vsyncpa [#allocation4], 1
    %137 = vsyncpa [#allocation5], 1

</llo_original>
